<compile_context>
chip_gen: v5e
topology: v5e:2x2
jax: 0.10.0
libtpu: 0.0.40
codegen_flags: <defaults>
</compile_context>

<pallas_src>
import jax
import jax.numpy as jnp
from jax.experimental import pallas as pl
from jax.experimental.pallas import tpu as pltpu

_SUB = 8  # sublanes per f32 vreg


def _round_up(n: int, m: int) -> int:
    return ((n + m - 1) // m) * m


def mlp_kernel(x_ref, w1_ref, b1_ref, w2_ref, b2_ref, w3_ref, b3_ref, o_ref):
    """Fused 3-layer MLP on a (24, TL) input tile; batch on sublanes+lanes.

    x_ref:  (3*8, TL) f32 VMEM tile; rows [f*8:(f+1)*8) hold feature f for a
            (8, TL) slab of samples.
    w*/b*:  PyTorch-layout (out, in) weights / (out,) biases in SMEM, read as
            scalars and broadcast against the batch slabs (pure VPU work).
    o_ref:  (8, TL) f32 VMEM tile (full, unmasked stores).
    """
    # (8, TL) slab per input feature — static, sublane-aligned views.
    xf = [x_ref[f * _SUB:(f + 1) * _SUB, :] for f in range(3)]

    # hidden1: Linear(3, 4) + ReLU (bias folded into the first FMA).
    h1 = []
    for o in range(4):
        acc = xf[0] * w1_ref[o, 0] + b1_ref[o]
        for i in range(1, 3):
            acc = acc + xf[i] * w1_ref[o, i]
        h1.append(jnp.maximum(acc, 0.0))

    # hidden2: Linear(4, 4) + ReLU.
    h2 = []
    for o in range(4):
        acc = h1[0] * w2_ref[o, 0] + b2_ref[o]
        for i in range(1, 4):
            acc = acc + h1[i] * w2_ref[o, i]
        h2.append(jnp.maximum(acc, 0.0))

    # output: Linear(4, 1).
    out = h2[0] * w3_ref[0, 0] + b3_ref[0]
    for i in range(1, 4):
        out = out + h2[i] * w3_ref[0, i]

    o_ref[...] = out


def simple_neural_net_forward(x, params, *, max_tile_lanes: int = 4096):
    """SimpleNeuralNet forward pass. x: (B, 3) f32 -> (B, 1) f32."""
    w1, b1, w2, b2, w3, b3 = (jnp.asarray(p, jnp.float32) for p in params)
    B = x.shape[0]

    # Fold batch onto (8 sublanes, L lanes); L is a multiple of the 128-lane
    # tile and of the lane tile size.  VMEM per step stays ~1 MiB at the cap.
    l_min = _round_up(max(-(-B // _SUB), 1), 128)
    tl = min(max_tile_lanes, l_min)
    num_l = _round_up(l_min, tl)
    b_pad = _SUB * num_l

    # (B, 3) -> zero-pad -> (3, 8, L) -> (24, L): sample n sits at
    # sublane n // L, lane n % L; feature f occupies rows [f*8, (f+1)*8).
    x_pad = jnp.zeros((b_pad, 3), jnp.float32).at[:B, :].set(
        x.astype(jnp.float32))
    x_t = x_pad.T.reshape(3, _SUB, num_l).reshape(3 * _SUB, num_l)

    smem = pl.BlockSpec(memory_space=pltpu.MemorySpace.SMEM)

    out_t = pl.pallas_call(
        mlp_kernel,
        out_shape=jax.ShapeDtypeStruct((_SUB, num_l), jnp.float32),
        grid=(num_l // tl,),
        in_specs=[
            pl.BlockSpec((3 * _SUB, tl), lambda i: (0, i)),  # packed x tile
            smem, smem,                                      # w1 (4,3), b1 (4,)
            smem, smem,                                      # w2 (4,4), b2 (4,)
            smem, smem,                                      # w3 (1,4), b3 (1,)
        ],
        out_specs=pl.BlockSpec((_SUB, tl), lambda i: (0, i)),
        compiler_params=pltpu.CompilerParams(
            dimension_semantics=("parallel",)),
    )(x_t, w1, b1, w2, b2, w3, b3)

    # (8, L) -> (B_pad,) -> (B, 1), dropping padding.
    return out_t.reshape(b_pad)[:B].reshape(B, 1)


def init_params(key):
    """PyTorch nn.Linear-style init: W (out,in), b (out,), U(+-1/sqrt(fan_in))."""
    def linear(k, fan_in, fan_out):
        kw, kb = jax.random.split(k)
        bound = 1.0 / jnp.sqrt(float(fan_in))
        w = jax.random.uniform(kw, (fan_out, fan_in), jnp.float32, -bound, bound)
        b = jax.random.uniform(kb, (fan_out,), jnp.float32, -bound, bound)
        return w, b

    k1, k2, k3 = jax.random.split(key, 3)
    w1, b1 = linear(k1, 3, 4)   # hidden1: Linear(3, 4)
    w2, b2 = linear(k2, 4, 4)   # hidden2: Linear(4, 4)
    w3, b3 = linear(k3, 4, 1)   # output : Linear(4, 1)
    return (w1, b1, w2, b2, w3, b3)


if __name__ == "__main__":
    key = jax.random.PRNGKey(0)
    kp, kx = jax.random.split(key)

    params = init_params(kp)
    x = jax.random.normal(kx, (8, 3), jnp.float32)   # batch=8, in_features=3

    out = simple_neural_net_forward(x, params)
    jax.block_until_ready(out)

    # Pure-JAX reference (PyTorch semantics: x @ W.T + b).
    w1, b1, w2, b2, w3, b3 = params
    h1 = jnp.maximum(x @ w1.T + b1, 0.0)
    h2 = jnp.maximum(h1 @ w2.T + b2, 0.0)
    ref = h2 @ w3.T + b3

    assert out.shape == (8, 1)
    assert jnp.allclose(out, ref, atol=1e-5, rtol=1e-5), "mismatch vs reference"

    print("KERNEL_OK")
</pallas_src>

<mosaic_0001>
module attributes {stable_mosaic.version = 11 : i64} {
  func.func @mlp_kernel(%arg0: i32, %arg1: memref<24x128xf32, #tpu.memory_space<vmem>>, %arg2: memref<4x3xf32, #tpu.memory_space<smem>>, %arg3: memref<4xf32, #tpu.memory_space<smem>>, %arg4: memref<4x4xf32, #tpu.memory_space<smem>>, %arg5: memref<4xf32, #tpu.memory_space<smem>>, %arg6: memref<1x4xf32, #tpu.memory_space<smem>>, %arg7: memref<1xf32, #tpu.memory_space<smem>>, %arg8: memref<8x128xf32, #tpu.memory_space<vmem>>) attributes {dimension_semantics = [#tpu.dimension_semantics<parallel>], iteration_bounds = array<i64: 1>, scalar_prefetch = 0 : i64, scratch_operands = 0 : i64, tpu.core_type = #tpu.core_type<tc>, window_params = [{transform_indices = @transform_0, window_bounds = array<i64: 24, 128>}, {transform_indices = @transform_1, window_bounds = array<i64: 4, 3>}, {transform_indices = @transform_2, window_bounds = array<i64: 4>}, {transform_indices = @transform_3, window_bounds = array<i64: 4, 4>}, {transform_indices = @transform_4, window_bounds = array<i64: 4>}, {transform_indices = @transform_5, window_bounds = array<i64: 1, 4>}, {transform_indices = @transform_6, window_bounds = array<i64: 1>}, {transform_indices = @transform_7, window_bounds = array<i64: 8, 128>}]} {
    %c0 = arith.constant 0 : index
    %c0_0 = arith.constant 0 : index
    %0 = vector.load %arg1[%c0, %c0_0] : memref<24x128xf32, #tpu.memory_space<vmem>>, vector<8x128xf32>
    %c8 = arith.constant 8 : index
    %c0_1 = arith.constant 0 : index
    %1 = vector.load %arg1[%c8, %c0_1] : memref<24x128xf32, #tpu.memory_space<vmem>>, vector<8x128xf32>
    %c16 = arith.constant 16 : index
    %c0_2 = arith.constant 0 : index
    %2 = vector.load %arg1[%c16, %c0_2] : memref<24x128xf32, #tpu.memory_space<vmem>>, vector<8x128xf32>
    %c0_3 = arith.constant 0 : index
    %c0_4 = arith.constant 0 : index
    %3 = memref.load %arg2[%c0_3, %c0_4] : memref<4x3xf32, #tpu.memory_space<smem>>
    %4 = vector.broadcast %3 : f32 to vector<8x128xf32>
    %5 = arith.mulf %0, %4 : vector<8x128xf32>
    %c0_5 = arith.constant 0 : index
    %6 = memref.load %arg3[%c0_5] : memref<4xf32, #tpu.memory_space<smem>>
    %7 = vector.broadcast %6 : f32 to vector<8x128xf32>
    %8 = arith.addf %5, %7 : vector<8x128xf32>
    %c0_6 = arith.constant 0 : index
    %c1 = arith.constant 1 : index
    %9 = memref.load %arg2[%c0_6, %c1] : memref<4x3xf32, #tpu.memory_space<smem>>
    %10 = vector.broadcast %9 : f32 to vector<8x128xf32>
    %11 = arith.mulf %1, %10 : vector<8x128xf32>
    %12 = arith.addf %8, %11 : vector<8x128xf32>
    %c0_7 = arith.constant 0 : index
    %c2 = arith.constant 2 : index
    %13 = memref.load %arg2[%c0_7, %c2] : memref<4x3xf32, #tpu.memory_space<smem>>
    %14 = vector.broadcast %13 : f32 to vector<8x128xf32>
    %15 = arith.mulf %2, %14 : vector<8x128xf32>
    %16 = arith.addf %12, %15 : vector<8x128xf32>
    %cst = arith.constant 0.000000e+00 : f32
    %17 = vector.broadcast %cst : f32 to vector<8x128xf32>
    %18 = arith.maximumf %16, %17 : vector<8x128xf32>
    %c1_8 = arith.constant 1 : index
    %c0_9 = arith.constant 0 : index
    %19 = memref.load %arg2[%c1_8, %c0_9] : memref<4x3xf32, #tpu.memory_space<smem>>
    %20 = vector.broadcast %19 : f32 to vector<8x128xf32>
    %21 = arith.mulf %0, %20 : vector<8x128xf32>
    %c1_10 = arith.constant 1 : index
    %22 = memref.load %arg3[%c1_10] : memref<4xf32, #tpu.memory_space<smem>>
    %23 = vector.broadcast %22 : f32 to vector<8x128xf32>
    %24 = arith.addf %21, %23 : vector<8x128xf32>
    %c1_11 = arith.constant 1 : index
    %c1_12 = arith.constant 1 : index
    %25 = memref.load %arg2[%c1_11, %c1_12] : memref<4x3xf32, #tpu.memory_space<smem>>
    %26 = vector.broadcast %25 : f32 to vector<8x128xf32>
    %27 = arith.mulf %1, %26 : vector<8x128xf32>
    %28 = arith.addf %24, %27 : vector<8x128xf32>
    %c1_13 = arith.constant 1 : index
    %c2_14 = arith.constant 2 : index
    %29 = memref.load %arg2[%c1_13, %c2_14] : memref<4x3xf32, #tpu.memory_space<smem>>
    %30 = vector.broadcast %29 : f32 to vector<8x128xf32>
    %31 = arith.mulf %2, %30 : vector<8x128xf32>
    %32 = arith.addf %28, %31 : vector<8x128xf32>
    %cst_15 = arith.constant 0.000000e+00 : f32
    %33 = vector.broadcast %cst_15 : f32 to vector<8x128xf32>
    %34 = arith.maximumf %32, %33 : vector<8x128xf32>
    %c2_16 = arith.constant 2 : index
    %c0_17 = arith.constant 0 : index
    %35 = memref.load %arg2[%c2_16, %c0_17] : memref<4x3xf32, #tpu.memory_space<smem>>
    %36 = vector.broadcast %35 : f32 to vector<8x128xf32>
    %37 = arith.mulf %0, %36 : vector<8x128xf32>
    %c2_18 = arith.constant 2 : index
    %38 = memref.load %arg3[%c2_18] : memref<4xf32, #tpu.memory_space<smem>>
    %39 = vector.broadcast %38 : f32 to vector<8x128xf32>
    %40 = arith.addf %37, %39 : vector<8x128xf32>
    %c2_19 = arith.constant 2 : index
    %c1_20 = arith.constant 1 : index
    %41 = memref.load %arg2[%c2_19, %c1_20] : memref<4x3xf32, #tpu.memory_space<smem>>
    %42 = vector.broadcast %41 : f32 to vector<8x128xf32>
    %43 = arith.mulf %1, %42 : vector<8x128xf32>
    %44 = arith.addf %40, %43 : vector<8x128xf32>
    %c2_21 = arith.constant 2 : index
    %c2_22 = arith.constant 2 : index
    %45 = memref.load %arg2[%c2_21, %c2_22] : memref<4x3xf32, #tpu.memory_space<smem>>
    %46 = vector.broadcast %45 : f32 to vector<8x128xf32>
    %47 = arith.mulf %2, %46 : vector<8x128xf32>
    %48 = arith.addf %44, %47 : vector<8x128xf32>
    %cst_23 = arith.constant 0.000000e+00 : f32
    %49 = vector.broadcast %cst_23 : f32 to vector<8x128xf32>
    %50 = arith.maximumf %48, %49 : vector<8x128xf32>
    %c3 = arith.constant 3 : index
    %c0_24 = arith.constant 0 : index
    %51 = memref.load %arg2[%c3, %c0_24] : memref<4x3xf32, #tpu.memory_space<smem>>
    %52 = vector.broadcast %51 : f32 to vector<8x128xf32>
    %53 = arith.mulf %0, %52 : vector<8x128xf32>
    %c3_25 = arith.constant 3 : index
    %54 = memref.load %arg3[%c3_25] : memref<4xf32, #tpu.memory_space<smem>>
    %55 = vector.broadcast %54 : f32 to vector<8x128xf32>
    %56 = arith.addf %53, %55 : vector<8x128xf32>
    %c3_26 = arith.constant 3 : index
    %c1_27 = arith.constant 1 : index
    %57 = memref.load %arg2[%c3_26, %c1_27] : memref<4x3xf32, #tpu.memory_space<smem>>
    %58 = vector.broadcast %57 : f32 to vector<8x128xf32>
    %59 = arith.mulf %1, %58 : vector<8x128xf32>
    %60 = arith.addf %56, %59 : vector<8x128xf32>
    %c3_28 = arith.constant 3 : index
    %c2_29 = arith.constant 2 : index
    %61 = memref.load %arg2[%c3_28, %c2_29] : memref<4x3xf32, #tpu.memory_space<smem>>
    %62 = vector.broadcast %61 : f32 to vector<8x128xf32>
    %63 = arith.mulf %2, %62 : vector<8x128xf32>
    %64 = arith.addf %60, %63 : vector<8x128xf32>
    %cst_30 = arith.constant 0.000000e+00 : f32
    %65 = vector.broadcast %cst_30 : f32 to vector<8x128xf32>
    %66 = arith.maximumf %64, %65 : vector<8x128xf32>
    %c0_31 = arith.constant 0 : index
    %c0_32 = arith.constant 0 : index
    %67 = memref.load %arg4[%c0_31, %c0_32] : memref<4x4xf32, #tpu.memory_space<smem>>
    %68 = vector.broadcast %67 : f32 to vector<8x128xf32>
    %69 = arith.mulf %18, %68 : vector<8x128xf32>
    %c0_33 = arith.constant 0 : index
    %70 = memref.load %arg5[%c0_33] : memref<4xf32, #tpu.memory_space<smem>>
    %71 = vector.broadcast %70 : f32 to vector<8x128xf32>
    %72 = arith.addf %69, %71 : vector<8x128xf32>
    %c0_34 = arith.constant 0 : index
    %c1_35 = arith.constant 1 : index
    %73 = memref.load %arg4[%c0_34, %c1_35] : memref<4x4xf32, #tpu.memory_space<smem>>
    %74 = vector.broadcast %73 : f32 to vector<8x128xf32>
    %75 = arith.mulf %34, %74 : vector<8x128xf32>
    %76 = arith.addf %72, %75 : vector<8x128xf32>
    %c0_36 = arith.constant 0 : index
    %c2_37 = arith.constant 2 : index
    %77 = memref.load %arg4[%c0_36, %c2_37] : memref<4x4xf32, #tpu.memory_space<smem>>
    %78 = vector.broadcast %77 : f32 to vector<8x128xf32>
    %79 = arith.mulf %50, %78 : vector<8x128xf32>
    %80 = arith.addf %76, %79 : vector<8x128xf32>
    %c0_38 = arith.constant 0 : index
    %c3_39 = arith.constant 3 : index
    %81 = memref.load %arg4[%c0_38, %c3_39] : memref<4x4xf32, #tpu.memory_space<smem>>
    %82 = vector.broadcast %81 : f32 to vector<8x128xf32>
    %83 = arith.mulf %66, %82 : vector<8x128xf32>
    %84 = arith.addf %80, %83 : vector<8x128xf32>
    %cst_40 = arith.constant 0.000000e+00 : f32
    %85 = vector.broadcast %cst_40 : f32 to vector<8x128xf32>
    %86 = arith.maximumf %84, %85 : vector<8x128xf32>
    %c1_41 = arith.constant 1 : index
    %c0_42 = arith.constant 0 : index
    %87 = memref.load %arg4[%c1_41, %c0_42] : memref<4x4xf32, #tpu.memory_space<smem>>
    %88 = vector.broadcast %87 : f32 to vector<8x128xf32>
    %89 = arith.mulf %18, %88 : vector<8x128xf32>
    %c1_43 = arith.constant 1 : index
    %90 = memref.load %arg5[%c1_43] : memref<4xf32, #tpu.memory_space<smem>>
    %91 = vector.broadcast %90 : f32 to vector<8x128xf32>
    %92 = arith.addf %89, %91 : vector<8x128xf32>
    %c1_44 = arith.constant 1 : index
    %c1_45 = arith.constant 1 : index
    %93 = memref.load %arg4[%c1_44, %c1_45] : memref<4x4xf32, #tpu.memory_space<smem>>
    %94 = vector.broadcast %93 : f32 to vector<8x128xf32>
    %95 = arith.mulf %34, %94 : vector<8x128xf32>
    %96 = arith.addf %92, %95 : vector<8x128xf32>
    %c1_46 = arith.constant 1 : index
    %c2_47 = arith.constant 2 : index
    %97 = memref.load %arg4[%c1_46, %c2_47] : memref<4x4xf32, #tpu.memory_space<smem>>
    %98 = vector.broadcast %97 : f32 to vector<8x128xf32>
    %99 = arith.mulf %50, %98 : vector<8x128xf32>
    %100 = arith.addf %96, %99 : vector<8x128xf32>
    %c1_48 = arith.constant 1 : index
    %c3_49 = arith.constant 3 : index
    %101 = memref.load %arg4[%c1_48, %c3_49] : memref<4x4xf32, #tpu.memory_space<smem>>
    %102 = vector.broadcast %101 : f32 to vector<8x128xf32>
    %103 = arith.mulf %66, %102 : vector<8x128xf32>
    %104 = arith.addf %100, %103 : vector<8x128xf32>
    %cst_50 = arith.constant 0.000000e+00 : f32
    %105 = vector.broadcast %cst_50 : f32 to vector<8x128xf32>
    %106 = arith.maximumf %104, %105 : vector<8x128xf32>
    %c2_51 = arith.constant 2 : index
    %c0_52 = arith.constant 0 : index
    %107 = memref.load %arg4[%c2_51, %c0_52] : memref<4x4xf32, #tpu.memory_space<smem>>
    %108 = vector.broadcast %107 : f32 to vector<8x128xf32>
    %109 = arith.mulf %18, %108 : vector<8x128xf32>
    %c2_53 = arith.constant 2 : index
    %110 = memref.load %arg5[%c2_53] : memref<4xf32, #tpu.memory_space<smem>>
    %111 = vector.broadcast %110 : f32 to vector<8x128xf32>
    %112 = arith.addf %109, %111 : vector<8x128xf32>
    %c2_54 = arith.constant 2 : index
    %c1_55 = arith.constant 1 : index
    %113 = memref.load %arg4[%c2_54, %c1_55] : memref<4x4xf32, #tpu.memory_space<smem>>
    %114 = vector.broadcast %113 : f32 to vector<8x128xf32>
    %115 = arith.mulf %34, %114 : vector<8x128xf32>
    %116 = arith.addf %112, %115 : vector<8x128xf32>
    %c2_56 = arith.constant 2 : index
    %c2_57 = arith.constant 2 : index
    %117 = memref.load %arg4[%c2_56, %c2_57] : memref<4x4xf32, #tpu.memory_space<smem>>
    %118 = vector.broadcast %117 : f32 to vector<8x128xf32>
    %119 = arith.mulf %50, %118 : vector<8x128xf32>
    %120 = arith.addf %116, %119 : vector<8x128xf32>
    %c2_58 = arith.constant 2 : index
    %c3_59 = arith.constant 3 : index
    %121 = memref.load %arg4[%c2_58, %c3_59] : memref<4x4xf32, #tpu.memory_space<smem>>
    %122 = vector.broadcast %121 : f32 to vector<8x128xf32>
    %123 = arith.mulf %66, %122 : vector<8x128xf32>
    %124 = arith.addf %120, %123 : vector<8x128xf32>
    %cst_60 = arith.constant 0.000000e+00 : f32
    %125 = vector.broadcast %cst_60 : f32 to vector<8x128xf32>
    %126 = arith.maximumf %124, %125 : vector<8x128xf32>
    %c3_61 = arith.constant 3 : index
    %c0_62 = arith.constant 0 : index
    %127 = memref.load %arg4[%c3_61, %c0_62] : memref<4x4xf32, #tpu.memory_space<smem>>
    %128 = vector.broadcast %127 : f32 to vector<8x128xf32>
    %129 = arith.mulf %18, %128 : vector<8x128xf32>
    %c3_63 = arith.constant 3 : index
    %130 = memref.load %arg5[%c3_63] : memref<4xf32, #tpu.memory_space<smem>>
    %131 = vector.broadcast %130 : f32 to vector<8x128xf32>
    %132 = arith.addf %129, %131 : vector<8x128xf32>
    %c3_64 = arith.constant 3 : index
    %c1_65 = arith.constant 1 : index
    %133 = memref.load %arg4[%c3_64, %c1_65] : memref<4x4xf32, #tpu.memory_space<smem>>
    %134 = vector.broadcast %133 : f32 to vector<8x128xf32>
    %135 = arith.mulf %34, %134 : vector<8x128xf32>
    %136 = arith.addf %132, %135 : vector<8x128xf32>
    %c3_66 = arith.constant 3 : index
    %c2_67 = arith.constant 2 : index
    %137 = memref.load %arg4[%c3_66, %c2_67] : memref<4x4xf32, #tpu.memory_space<smem>>
    %138 = vector.broadcast %137 : f32 to vector<8x128xf32>
    %139 = arith.mulf %50, %138 : vector<8x128xf32>
    %140 = arith.addf %136, %139 : vector<8x128xf32>
    %c3_68 = arith.constant 3 : index
    %c3_69 = arith.constant 3 : index
    %141 = memref.load %arg4[%c3_68, %c3_69] : memref<4x4xf32, #tpu.memory_space<smem>>
    %142 = vector.broadcast %141 : f32 to vector<8x128xf32>
    %143 = arith.mulf %66, %142 : vector<8x128xf32>
    %144 = arith.addf %140, %143 : vector<8x128xf32>
    %cst_70 = arith.constant 0.000000e+00 : f32
    %145 = vector.broadcast %cst_70 : f32 to vector<8x128xf32>
    %146 = arith.maximumf %144, %145 : vector<8x128xf32>
    %c0_71 = arith.constant 0 : index
    %c0_72 = arith.constant 0 : index
    %147 = memref.load %arg6[%c0_71, %c0_72] : memref<1x4xf32, #tpu.memory_space<smem>>
    %148 = vector.broadcast %147 : f32 to vector<8x128xf32>
    %149 = arith.mulf %86, %148 : vector<8x128xf32>
    %c0_73 = arith.constant 0 : index
    %150 = memref.load %arg7[%c0_73] : memref<1xf32, #tpu.memory_space<smem>>
    %151 = vector.broadcast %150 : f32 to vector<8x128xf32>
    %152 = arith.addf %149, %151 : vector<8x128xf32>
    %c0_74 = arith.constant 0 : index
    %c1_75 = arith.constant 1 : index
    %153 = memref.load %arg6[%c0_74, %c1_75] : memref<1x4xf32, #tpu.memory_space<smem>>
    %154 = vector.broadcast %153 : f32 to vector<8x128xf32>
    %155 = arith.mulf %106, %154 : vector<8x128xf32>
    %156 = arith.addf %152, %155 : vector<8x128xf32>
    %c0_76 = arith.constant 0 : index
    %c2_77 = arith.constant 2 : index
    %157 = memref.load %arg6[%c0_76, %c2_77] : memref<1x4xf32, #tpu.memory_space<smem>>
    %158 = vector.broadcast %157 : f32 to vector<8x128xf32>
    %159 = arith.mulf %126, %158 : vector<8x128xf32>
    %160 = arith.addf %156, %159 : vector<8x128xf32>
    %c0_78 = arith.constant 0 : index
    %c3_79 = arith.constant 3 : index
    %161 = memref.load %arg6[%c0_78, %c3_79] : memref<1x4xf32, #tpu.memory_space<smem>>
    %162 = vector.broadcast %161 : f32 to vector<8x128xf32>
    %163 = arith.mulf %146, %162 : vector<8x128xf32>
    %164 = arith.addf %160, %163 : vector<8x128xf32>
    %c0_80 = arith.constant 0 : index
    %c0_81 = arith.constant 0 : index
    %165 = vector.load %arg8[%c0_80, %c0_81] : memref<8x128xf32, #tpu.memory_space<vmem>>, vector<8x128xf32>
    tpu.vector_store %arg8[%c0_80, %c0_81], %164 {strides = array<i32>} : memref<8x128xf32, #tpu.memory_space<vmem>>, vector<8x128xf32>,
    return
  }
  func.func @transform_0(%arg0: i32) -> (i32, i32) {
    %c0_i32 = arith.constant 0 : i32
    %c0_i32_0 = arith.constant 0 : i32
    return %c0_i32, %arg0 : i32, i32
  }
  func.func @transform_1(%arg0: i32) -> (i32, i32) {
    %c0_i32 = arith.constant 0 : i32
    %c0_i32_0 = arith.constant 0 : i32
    %c0_i32_1 = arith.constant 0 : i32
    return %c0_i32, %c0_i32_0 : i32, i32
  }
  func.func @transform_2(%arg0: i32) -> i32 {
    %c0_i32 = arith.constant 0 : i32
    %c0_i32_0 = arith.constant 0 : i32
    return %c0_i32 : i32
  }
  func.func @transform_3(%arg0: i32) -> (i32, i32) {
    %c0_i32 = arith.constant 0 : i32
    %c0_i32_0 = arith.constant 0 : i32
    %c0_i32_1 = arith.constant 0 : i32
    return %c0_i32, %c0_i32_0 : i32, i32
  }
  func.func @transform_4(%arg0: i32) -> i32 {
    %c0_i32 = arith.constant 0 : i32
    %c0_i32_0 = arith.constant 0 : i32
    return %c0_i32 : i32
  }
  func.func @transform_5(%arg0: i32) -> (i32, i32) {
    %c0_i32 = arith.constant 0 : i32
    %c0_i32_0 = arith.constant 0 : i32
    %c0_i32_1 = arith.constant 0 : i32
    return %c0_i32, %c0_i32_0 : i32, i32
  }
  func.func @transform_6(%arg0: i32) -> i32 {
    %c0_i32 = arith.constant 0 : i32
    %c0_i32_0 = arith.constant 0 : i32
    return %c0_i32 : i32
  }
  func.func @transform_7(%arg0: i32) -> (i32, i32) {
    %c0_i32 = arith.constant 0 : i32
    %c0_i32_0 = arith.constant 0 : i32
    return %c0_i32, %arg0 : i32, i32
  }
}

</mosaic_0001>

<llo_original>
// kernel: tpu_custom_call.1
$region0: #{tpu_custom_call.1}
  #allocation0 [shape = 'u32[]', space=smem, size = 0x4, offset = 0x4, fixed_abs, tag = 'smem constant byte address 0x4 - core index']
  #allocation1 [shape = 'u32[72,128]{1,0:T(1,128)}', space=vmem, size = 0x9000, scoped, tag = 'internal scratch']
  #allocation2 [shape = 'f32[1]{0:T(128)S(6)}', space=smem, size = 0x200, scoped, tag = 'scoped memory for tpu_custom_call.1']
  %s0 = inlined_call_operand.hbm [shape: f32[24,128], index: 0, kind: input, shape index: {}]
  %s1 = inlined_call_operand.hbm [shape: f32[4,3], index: 1, kind: input, shape index: {}]
  %s2 = inlined_call_operand.hbm [shape: f32[4], index: 2, kind: input, shape index: {}]
  %s3 = inlined_call_operand.vmem [shape: f32[4,4], index: 3, kind: input, shape index: {}]
  %s4 = inlined_call_operand.vmem [shape: f32[4], index: 4, kind: input, shape index: {}]
  %s5 = inlined_call_operand.vmem [shape: f32[1,4], index: 5, kind: input, shape index: {}]
  %s6 = inlined_call_operand.<no memory space> [shape: f32[1], index: 6, kind: input, shape index: {}]
  %s7 = inlined_call_operand.hbm [shape: f32[8,128], index: 7, kind: output, shape index: {}]
  %s8 = sld [smem:[#allocation0]]
  $region62: #{tpu_custom_call.1} parent=0
    _
  %s10 = ssub.s32 1, %s8
  %s11 = scalar_select 0, %s10, %s8
  %12 = sst [smem:[#allocation2]] %s6
  $region1: #{tpu_custom_call.1} parent=0
    #allocation3 [shape = 'u8[12288]{0}', space=vmem, size = 0x3000, scoped, tag = 'input window, operand 0, single buffered']
    #allocation4 [shape = 's32[1]{0}', space=sflag, size = 0x4, scoped, tag = 'scoped memory for tpu_custom_call.1']
    #allocation5 [shape = 's32[1]{0}', space=sflag, size = 0x4, scoped, tag = 'scoped memory for tpu_custom_call.1']
    #allocation6 [shape = 's32[1]{0}', space=sflag, size = 0x4, scoped, tag = 'scoped memory for tpu_custom_call.1']
    #allocation7 [shape = 's32[1]{0}', space=sflag, size = 0x4, scoped, tag = 'scoped memory for tpu_custom_call.1']
    #allocation8 [shape = 'u8[2048]{0}', space=smem, size = 0x800, scoped, tag = 'input window, operand 1, single buffered']
    #allocation9 [shape = 'u8[512]{0}', space=smem, size = 0x200, scoped, tag = 'input window, operand 2, single buffered']
    #allocation10 [shape = 's32[1]{0}', space=sflag, size = 0x4, scoped, tag = 'scoped memory for tpu_custom_call.1']
    #allocation11 [shape = 'u8[2048]{0}', space=smem, size = 0x800, scoped, tag = 'input window, operand 3, single buffered']
    #allocation12 [shape = 'u8[512]{0}', space=smem, size = 0x200, scoped, tag = 'input window, operand 4, single buffered']
    #allocation13 [shape = 's32[1]{0}', space=sflag, size = 0x4, scoped, tag = 'scoped memory for tpu_custom_call.1']
    #allocation14 [shape = 'u8[512]{0}', space=smem, size = 0x200, scoped, tag = 'input window, operand 5, single buffered']
    #allocation15 [shape = 'u8[4096]{0}', space=vmem, size = 0x1000, scoped, tag = 'output window, operand 0, single buffered']
    %13 = vsyncpa [#allocation4], 0
    %14 = vsyncpa [#allocation6], 0
    %15 = vsyncpa [#allocation10], 0
    %16 = vsyncpa [#allocation7], 0
    %17 = vsyncpa [#allocation13], 0
    %18 = vsyncpa [#allocation5], 0
    // Predicated region
    $region2: #{tpu_custom_call.1} parent=1 // pred_check
      _
    $region3: #{tpu_custom_call.1} parent=1 // pred_check_branch
      %20 = sbr.rel (0) target = $region5
    $region4: #{tpu_custom_call.1} parent=1 // pred_region
      %22 = vsyncadd [#allocation4], 0
      %s23 = sshll.u32 %s0, 4
      %s24 = int_to_ptr.hbm [resolvable:$true] %s23
      %s25 = sshll.u32 [#allocation3], 4
      %s26 = int_to_ptr.vmem [resolvable:$true] %s25
      %31 = dma.hbm_to_vmem [thread:$0]  %s24, 384, %s26, [#allocation4], 128, 128, 8
    $region5: #{tpu_custom_call.1} parent=1 // pred_fallthru
      _
    // Predicated region
    $region6: #{tpu_custom_call.1} parent=1 // pred_check
      _
    $region7: #{tpu_custom_call.1} parent=1 // pred_check_branch
      %33 = sbr.rel (0) target = $region9
    $region8: #{tpu_custom_call.1} parent=1 // pred_region
      %35 = vsyncadd [#allocation6], 0
      %s37 = sshll.u32 %s1, 4
      %s38 = int_to_ptr.hbm [resolvable:$true] %s37
      %40 = dma.hbm_to_smem %s38, 64, [#allocation8], [#allocation6]
    $region9: #{tpu_custom_call.1} parent=1 // pred_fallthru
      _
    // Predicated region
    $region10: #{tpu_custom_call.1} parent=1 // pred_check
      _
    $region11: #{tpu_custom_call.1} parent=1 // pred_check_branch
      %42 = sbr.rel (0) target = $region13
    $region12: #{tpu_custom_call.1} parent=1 // pred_region
      %44 = vsyncadd [#allocation10], 0
      %s46 = sshll.u32 %s2, 4
      %s47 = int_to_ptr.hbm [resolvable:$true] %s46
      %49 = dma.hbm_to_smem %s47, 16, [#allocation9], [#allocation10]
    $region13: #{tpu_custom_call.1} parent=1 // pred_fallthru
      _
    // Predicated region
    $region14: #{tpu_custom_call.1} parent=1 // pred_check
      _
    $region15: #{tpu_custom_call.1} parent=1 // pred_check_branch
      %51 = sbr.rel (0) target = $region17
    $region16: #{tpu_custom_call.1} parent=1 // pred_region
      %53 = vsyncadd [#allocation7], 0
      %s55 = sshll.u32 %s3, 4
      %s56 = int_to_ptr.vmem [resolvable:$true] %s55
      %58 = dma.vmem_to_smem %s56, 64, [#allocation11], [#allocation7]
    $region17: #{tpu_custom_call.1} parent=1 // pred_fallthru
      _
    // Predicated region
    $region18: #{tpu_custom_call.1} parent=1 // pred_check
      _
    $region19: #{tpu_custom_call.1} parent=1 // pred_check_branch
      %60 = sbr.rel (0) target = $region21
    $region20: #{tpu_custom_call.1} parent=1 // pred_region
      %62 = vsyncadd [#allocation13], 0
      %s64 = sshll.u32 %s4, 4
      %s65 = int_to_ptr.vmem [resolvable:$true] %s64
      %67 = dma.vmem_to_smem %s65, 16, [#allocation12], [#allocation13]
    $region21: #{tpu_custom_call.1} parent=1 // pred_fallthru
      _
    // Predicated region
    $region22: #{tpu_custom_call.1} parent=1 // pred_check
      _
    $region23: #{tpu_custom_call.1} parent=1 // pred_check_branch
      %69 = sbr.rel (0) target = $region25
    $region24: #{tpu_custom_call.1} parent=1 // pred_region
      %71 = vsyncadd [#allocation13], 0
      %s73 = sshll.u32 %s5, 4
      %s74 = int_to_ptr.vmem [resolvable:$true] %s73
      %76 = dma.vmem_to_smem %s74, 16, [#allocation14], [#allocation13]
    $region25: #{tpu_custom_call.1} parent=1 // pred_fallthru
      _
    // Predicated region
    $region26: #{tpu_custom_call.1} parent=1 // pred_check
      _
    $region27: #{tpu_custom_call.1} parent=1 // pred_check_branch
      %78 = sbr.rel (0) target = $region29
    $region28: #{tpu_custom_call.1} parent=1 // pred_region
      _
    $region29: #{tpu_custom_call.1} parent=1 // pred_fallthru
      _
    // Predicated region
    $region30: #{tpu_custom_call.1} parent=1 // pred_check
      _
    $region31: #{tpu_custom_call.1} parent=1 // pred_check_branch
      %80 = sbr.rel (0) target = $region33
    $region32: #{tpu_custom_call.1} parent=1 // pred_region
      %82 = dma.done [#allocation4], 384
    $region33: #{tpu_custom_call.1} parent=1 // pred_fallthru
      _
    // Predicated region
    $region34: #{tpu_custom_call.1} parent=1 // pred_check
      _
    $region35: #{tpu_custom_call.1} parent=1 // pred_check_branch
      %84 = sbr.rel (0) target = $region37
    $region36: #{tpu_custom_call.1} parent=1 // pred_region
      %86 = dma.done [#allocation6], 64
    $region37: #{tpu_custom_call.1} parent=1 // pred_fallthru
      _
    // Predicated region
    $region38: #{tpu_custom_call.1} parent=1 // pred_check
      _
    $region39: #{tpu_custom_call.1} parent=1 // pred_check_branch
      %88 = sbr.rel (0) target = $region41
    $region40: #{tpu_custom_call.1} parent=1 // pred_region
      %90 = dma.done [#allocation10], 16
    $region41: #{tpu_custom_call.1} parent=1 // pred_fallthru
      _
    // Predicated region
    $region42: #{tpu_custom_call.1} parent=1 // pred_check
      _
    $region43: #{tpu_custom_call.1} parent=1 // pred_check_branch
      %92 = sbr.rel (0) target = $region45
    $region44: #{tpu_custom_call.1} parent=1 // pred_region
      %94 = dma.done [#allocation7], 64
    $region45: #{tpu_custom_call.1} parent=1 // pred_fallthru
      _
    // Predicated region
    $region46: #{tpu_custom_call.1} parent=1 // pred_check
      _
    $region47: #{tpu_custom_call.1} parent=1 // pred_check_branch
      %96 = sbr.rel (0) target = $region49
    $region48: #{tpu_custom_call.1} parent=1 // pred_region
      %98 = dma.done [#allocation13], 16
    $region49: #{tpu_custom_call.1} parent=1 // pred_fallthru
      _
    // Predicated region
    $region50: #{tpu_custom_call.1} parent=1 // pred_check
      _
    $region51: #{tpu_custom_call.1} parent=1 // pred_check_branch
      %100 = sbr.rel (0) target = $region53
    $region52: #{tpu_custom_call.1} parent=1 // pred_region
      %102 = dma.done [#allocation13], 16
    $region53: #{tpu_custom_call.1} parent=1 // pred_fallthru
      _
    %103 = sfence
    %v104 = vld [vmem:[#allocation3] sm:$0xff]
    %v105 = vld [vmem:[#allocation3 + $0x8] sm:$0xff]
    %v106 = vld [vmem:[#allocation3 + $0x10] sm:$0xff]
    %s107 = sld [smem:[#allocation8]]
    %v108 = vstv %s107
    %v109 = vmul.f32 %v104, %v108
    %s110 = sld [smem:[#allocation9]]
    %v111 = vstv %s110
    %v112 = vadd.f32 %v109, %v111
    %s113 = sld [smem:[#allocation8 + $0x1]]
    %v114 = vstv %s113
    %v115 = vmul.f32 %v105, %v114
    %v116 = vadd.f32 %v112, %v115
    %s117 = sld [smem:[#allocation8 + $0x2]]
    %v118 = vstv %s117
    %v119 = vmul.f32 %v106, %v118
    %v120 = vadd.f32 %v116, %v119
    %v121 = vmax.f32 %v120, 0.0
    %s122 = sld [smem:[#allocation8 + $0x80]]
    %v123 = vstv %s122
    %v124 = vmul.f32 %v104, %v123
    %s125 = sld [smem:[#allocation9 + $0x1]]
    %v126 = vstv %s125
    %v127 = vadd.f32 %v124, %v126
    %s128 = sld [smem:[#allocation8 + $0x81]]
    %v129 = vstv %s128
    %v130 = vmul.f32 %v105, %v129
    %v131 = vadd.f32 %v127, %v130
    %s132 = sld [smem:[#allocation8 + $0x82]]
    %v133 = vstv %s132
    %v134 = vmul.f32 %v106, %v133
    %v135 = vadd.f32 %v131, %v134
    %v136 = vmax.f32 %v135, 0.0
    %s137 = sld [smem:[#allocation8 + $0x100]]
    %v138 = vstv %s137
    %v139 = vmul.f32 %v104, %v138
    %s140 = sld [smem:[#allocation9 + $0x2]]
    %v141 = vstv %s140
    %v142 = vadd.f32 %v139, %v141
    %s143 = sld [smem:[#allocation8 + $0x101]]
    %v144 = vstv %s143
    %v145 = vmul.f32 %v105, %v144
    %v146 = vadd.f32 %v142, %v145
    %s147 = sld [smem:[#allocation8 + $0x102]]
    %v148 = vstv %s147
    %v149 = vmul.f32 %v106, %v148
    %v150 = vadd.f32 %v146, %v149
    %v151 = vmax.f32 %v150, 0.0
    %s152 = sld [smem:[#allocation8 + $0x180]]
    %v153 = vstv %s152
    %v154 = vmul.f32 %v104, %v153
    %s155 = sld [smem:[#allocation9 + $0x3]]
    %v156 = vstv %s155
    %v157 = vadd.f32 %v154, %v156
    %s158 = sld [smem:[#allocation8 + $0x181]]
    %v159 = vstv %s158
    %v160 = vmul.f32 %v105, %v159
    %v161 = vadd.f32 %v157, %v160
    %s162 = sld [smem:[#allocation8 + $0x182]]
    %v163 = vstv %s162
    %v164 = vmul.f32 %v106, %v163
    %v165 = vadd.f32 %v161, %v164
    %v166 = vmax.f32 %v165, 0.0
    %s167 = sld [smem:[#allocation11]]
    %v168 = vstv %s167
    %v169 = vmul.f32 %v121, %v168
    %s170 = sld [smem:[#allocation12]]
    %v171 = vstv %s170
    %v172 = vadd.f32 %v169, %v171
    %s173 = sld [smem:[#allocation11 + $0x1]]
    %v174 = vstv %s173
    %v175 = vmul.f32 %v136, %v174
    %v176 = vadd.f32 %v172, %v175
    %s177 = sld [smem:[#allocation11 + $0x2]]
    %v178 = vstv %s177
    %v179 = vmul.f32 %v151, %v178
    %v180 = vadd.f32 %v176, %v179
    %s181 = sld [smem:[#allocation11 + $0x3]]
    %v182 = vstv %s181
    %v183 = vmul.f32 %v166, %v182
    %v184 = vadd.f32 %v180, %v183
    %v185 = vmax.f32 %v184, 0.0
    %s186 = sld [smem:[#allocation11 + $0x80]]
    %v187 = vstv %s186
    %v188 = vmul.f32 %v121, %v187
    %s189 = sld [smem:[#allocation12 + $0x1]]
    %v190 = vstv %s189
    %v191 = vadd.f32 %v188, %v190
    %s192 = sld [smem:[#allocation11 + $0x81]]
    %v193 = vstv %s192
    %v194 = vmul.f32 %v136, %v193
    %v195 = vadd.f32 %v191, %v194
    %s196 = sld [smem:[#allocation11 + $0x82]]
    %v197 = vstv %s196
    %v198 = vmul.f32 %v151, %v197
    %v199 = vadd.f32 %v195, %v198
    %s200 = sld [smem:[#allocation11 + $0x83]]
    %v201 = vstv %s200
    %v202 = vmul.f32 %v166, %v201
    %v203 = vadd.f32 %v199, %v202
    %v204 = vmax.f32 %v203, 0.0
    %s205 = sld [smem:[#allocation11 + $0x100]]
    %v206 = vstv %s205
    %v207 = vmul.f32 %v121, %v206
    %s208 = sld [smem:[#allocation12 + $0x2]]
    %v209 = vstv %s208
    %v210 = vadd.f32 %v207, %v209
    %s211 = sld [smem:[#allocation11 + $0x101]]
    %v212 = vstv %s211
    %v213 = vmul.f32 %v136, %v212
    %v214 = vadd.f32 %v210, %v213
    %s215 = sld [smem:[#allocation11 + $0x102]]
    %v216 = vstv %s215
    %v217 = vmul.f32 %v151, %v216
    %v218 = vadd.f32 %v214, %v217
    %s219 = sld [smem:[#allocation11 + $0x103]]
    %v220 = vstv %s219
    %v221 = vmul.f32 %v166, %v220
    %v222 = vadd.f32 %v218, %v221
    %v223 = vmax.f32 %v222, 0.0
    %s224 = sld [smem:[#allocation11 + $0x180]]
    %v225 = vstv %s224
    %v226 = vmul.f32 %v121, %v225
    %s227 = sld [smem:[#allocation12 + $0x3]]
    %v228 = vstv %s227
    %v229 = vadd.f32 %v226, %v228
    %s230 = sld [smem:[#allocation11 + $0x181]]
    %v231 = vstv %s230
    %v232 = vmul.f32 %v136, %v231
    %v233 = vadd.f32 %v229, %v232
    %s234 = sld [smem:[#allocation11 + $0x182]]
    %v235 = vstv %s234
    %v236 = vmul.f32 %v151, %v235
    %v237 = vadd.f32 %v233, %v236
    %s238 = sld [smem:[#allocation11 + $0x183]]
    %v239 = vstv %s238
    %v240 = vmul.f32 %v166, %v239
    %v241 = vadd.f32 %v237, %v240
    %v242 = vmax.f32 %v241, 0.0
    %s243 = sld [smem:[#allocation14]]
    %v244 = vstv %s243
    %v245 = vmul.f32 %v185, %v244
    %s246 = sld [smem:[#allocation2]]
    %v247 = vstv %s246
    %v248 = vadd.f32 %v245, %v247
    %s249 = sld [smem:[#allocation14 + $0x1]]
    %v250 = vstv %s249
    %v251 = vmul.f32 %v204, %v250
    %v252 = vadd.f32 %v248, %v251
    %s253 = sld [smem:[#allocation14 + $0x2]]
    %v254 = vstv %s253
    %v255 = vmul.f32 %v223, %v254
    %v256 = vadd.f32 %v252, %v255
    %s257 = sld [smem:[#allocation14 + $0x3]]
    %v258 = vstv %s257
    %v259 = vmul.f32 %v242, %v258
    %v260 = vadd.f32 %v256, %v259
    %261 = vst [vmem:[#allocation15] sm:$0xff] %v260
    // Predicated region
    $region54: #{tpu_custom_call.1} parent=1 // pred_check
      _
    $region55: #{tpu_custom_call.1} parent=1 // pred_check_branch
      %263 = sbr.rel (0) target = $region57
    $region56: #{tpu_custom_call.1} parent=1 // pred_region
      %265 = vsyncadd [#allocation5], 0
      %s267 = sshll.u32 [#allocation15], 4
      %s268 = int_to_ptr.vmem [resolvable:$true] %s267
      %s269 = sshll.u32 %s7, 4
      %s270 = int_to_ptr.hbm [resolvable:$true] %s269
      %272 = dma.vmem_to_hbm [thread:$0]  %s268, 128, %s270, [#allocation5]
    $region57: #{tpu_custom_call.1} parent=1 // pred_fallthru
      _
    // Predicated region
    $region58: #{tpu_custom_call.1} parent=1 // pred_check
      _
    $region59: #{tpu_custom_call.1} parent=1 // pred_check_branch
      %274 = sbr.rel (0) target = $region61
    $region60: #{tpu_custom_call.1} parent=1 // pred_region
      %276 = dma.done [#allocation5], 128
    $region61: #{tpu_custom_call.1} parent=1 // pred_fallthru
      _
    %277 = vsyncpa [#allocation4], 1
    %278 = vsyncpa [#allocation5], 1
    %279 = vsyncpa [#allocation6], 1
    %280 = vsyncpa [#allocation10], 1
    %281 = vsyncpa [#allocation7], 1
    %282 = vsyncpa [#allocation13], 1

</llo_original>
